<compile_context>
chip_gen: v6e
topology: v6e:2x2x1
jax: 0.10.0
libtpu: 0.0.40
codegen_flags: <defaults>
</compile_context>

<pallas_src>
import functools

import jax
import jax.numpy as jnp
from jax.experimental import pallas as pl
from jax.experimental.pallas import tpu as pltpu


def _supcon_kernel(a_ref, psum_ref, ct_ref, per_ref, *,
                   inv_t, neg_t_over_bt, num_pos):
    # a_ref:    [TM, D]  anchor tile (features[:, 0])
    # psum_ref: [TM, D]  sum over the other V-1 views of the same sample
    # ct_ref:   [D,  N]  contrast features, pre-transposed (N = B * V)
    # per_ref:  [TM, 1]  per-anchor (non-reduced) loss
    a32 = a_ref[...].astype(jnp.float32)                 # [TM, D]
    a_scaled = a32 * inv_t                               # fold 1/T into the LHS
    ct = ct_ref[...]                                     # [D, N]

    # scores on the MXU with f32 accumulation; RHS already lane-dense in N.
    s = jnp.dot(a_scaled.astype(ct.dtype), ct,
                preferred_element_type=jnp.float32)      # [TM, N]

    tm, n = s.shape
    row0 = pl.program_id(0) * tm                          # global row offset
    row = jax.lax.broadcasted_iota(jnp.int32, (tm, n), 0) + row0
    col = jax.lax.broadcasted_iota(jnp.int32, (tm, n), 1)
    not_self = col != row

    # Numerically stable log-sum-exp over non-self columns. Matches PyTorch:
    # max over the full row, self excluded only from the denominator.
    logits_max = jnp.max(s, axis=-1, keepdims=True)               # [TM, 1]
    exp_l = jnp.where(not_self, jnp.exp(s - logits_max), 0.0)     # [TM, N]
    log_denom = jnp.log(jnp.sum(exp_l, axis=-1, keepdims=True))   # [TM, 1]

    # Sum of positive logits = <a/T, sum_{v>=1} f_v>; positive count = V - 1.
    pos_sum = jnp.sum(a_scaled * psum_ref[...].astype(jnp.float32),
                      axis=-1, keepdims=True)                     # [TM, 1]
    mean_log_prob_pos = pos_sum * (1.0 / num_pos) - logits_max - log_denom

    per_ref[...] = neg_t_over_bt * mean_log_prob_pos


def supcon_loss(features, temperature=0.07, base_temperature=0.07,
                block_m=256, operand_dtype=None):
    """features: [B, V, D] float array.

    Returns (scalar mean loss, per-anchor non-reduced loss of shape [B]),
    matching SupConLoss.forward with contrast_mode='one', labels=None, mask=None.
    Set operand_dtype=jnp.bfloat16 on v6e/v7x for a faster MXU path (f32 accum).
    """
    B, V, D = features.shape
    if V < 2:
        raise ValueError("SupCon/SimCLR requires at least 2 views (V >= 2).")
    features = features.astype(jnp.float32)
    N = B * V

    # contrast_feature = cat(unbind(features, 1), 0) -> [N, D]; feed it
    # pre-transposed as [D, N] so the kernel never transposes in VMEM.
    contrast_t = jnp.transpose(features, (2, 1, 0)).reshape(D, N)
    anchor = features[:, 0, :]                        # contrast_mode == 'one'
    pos_sum = jnp.sum(features[:, 1:, :], axis=1)     # [B, D] sum of positives

    op_dtype = jnp.float32 if operand_dtype is None else operand_dtype
    contrast_t = contrast_t.astype(op_dtype)
    anchor_in = anchor.astype(op_dtype)
    pos_in = pos_sum.astype(op_dtype)

    # Tile over anchor rows: single full-extent tile when B is small, otherwise
    # a sublane-aligned tile with zero-padded (and later discarded) rows.
    if B <= block_m:
        tm = B
        bp = B
    else:
        tm = max(8, (block_m // 8) * 8)
        bp = pl.cdiv(B, tm) * tm
        pad = bp - B
        if pad:
            anchor_in = jnp.pad(anchor_in, ((0, pad), (0, 0)))
            pos_in = jnp.pad(pos_in, ((0, pad), (0, 0)))
    grid = (bp // tm,)

    # Rough VMEM watermark: double-buffered inputs + [TM, N] f32 temporaries.
    ib = jnp.dtype(op_dtype).itemsize
    est = (2 * (2 * tm * D * ib) + 2 * D * N * ib + 3 * tm * N * 4 + 2 * tm * 4)
    vmem_limit = int(min(max(2 * est, 32 * 1024 * 1024), 64 * 1024 * 1024))

    kernel = functools.partial(
        _supcon_kernel,
        inv_t=float(1.0 / temperature),
        neg_t_over_bt=float(-(temperature / base_temperature)),
        num_pos=float(V - 1),
    )

    per = pl.pallas_call(
        kernel,
        out_shape=jax.ShapeDtypeStruct((bp, 1), jnp.float32),
        grid_spec=pltpu.PrefetchScalarGridSpec(
            num_scalar_prefetch=0,
            grid=grid,
            in_specs=[
                pl.BlockSpec((tm, D), lambda i: (i, 0)),   # anchor tile
                pl.BlockSpec((tm, D), lambda i: (i, 0)),   # positive-sum tile
                pl.BlockSpec((D, N), lambda i: (0, 0)),    # contrast (resident)
            ],
            out_specs=pl.BlockSpec((tm, 1), lambda i: (i, 0)),
        ),
        compiler_params=pltpu.CompilerParams(
            dimension_semantics=("parallel",),
            vmem_limit_bytes=vmem_limit,
        ),
    )(anchor_in, pos_in, contrast_t)

    per = per[:B, 0]
    # loss.view(anchor_count, batch_size).mean() with anchor_count == 1.
    loss = jnp.mean(per)
    return loss, per


def _reference(features, temperature=0.07, base_temperature=0.07):
    # Pure-JAX transcription of the PyTorch forward (sanity check).
    B, V, D = features.shape
    contrast = jnp.transpose(features, (1, 0, 2)).reshape(V * B, D)
    anchor = features[:, 0, :]
    s = anchor @ contrast.T / temperature
    logits = s - jnp.max(s, axis=1, keepdims=True)
    mask = jnp.tile(jnp.eye(B, dtype=jnp.float32), (1, V))
    logits_mask = jnp.ones((B, V * B), jnp.float32).at[
        jnp.arange(B), jnp.arange(B)].set(0.0)
    mask = mask * logits_mask
    exp_logits = jnp.exp(logits) * logits_mask
    log_prob = logits - jnp.log(exp_logits.sum(1, keepdims=True))
    mlpp = (mask * log_prob).sum(1) / mask.sum(1)
    per = -(temperature / base_temperature) * mlpp
    return per.mean(), per


if __name__ == "__main__":
    # Case 1: small single-tile path.
    key = jax.random.PRNGKey(0)
    B, V, D = 8, 2, 32
    feats = jax.random.normal(key, (B, V, D), dtype=jnp.float32)
    feats = feats / jnp.linalg.norm(feats, axis=-1, keepdims=True)

    loss, per = supcon_loss(feats)
    jax.block_until_ready((loss, per))
    ref_loss, ref_per = _reference(feats)
    assert jnp.allclose(loss, ref_loss, atol=1e-4, rtol=1e-4), (loss, ref_loss)
    assert jnp.allclose(per, ref_per, atol=1e-4, rtol=1e-4)

    # Case 2: gridded + padded multi-tile path (B not a multiple of the tile).
    key2 = jax.random.PRNGKey(0)
    B2, V2, D2 = 20, 3, 64
    feats2 = jax.random.normal(key2, (B2, V2, D2), dtype=jnp.float32)
    feats2 = feats2 / jnp.linalg.norm(feats2, axis=-1, keepdims=True)

    loss2, per2 = supcon_loss(feats2, block_m=8)
    jax.block_until_ready((loss2, per2))
    ref_loss2, ref_per2 = _reference(feats2)
    assert jnp.allclose(loss2, ref_loss2, atol=1e-4, rtol=1e-4), (loss2, ref_loss2)
    assert jnp.allclose(per2, ref_per2, atol=1e-4, rtol=1e-4)

    print("KERNEL_OK")
</pallas_src>

<mosaic_0001>
module attributes {stable_mosaic.version = 11 : i64} {
  func.func @_supcon_kernel(%arg0: i32, %arg1: memref<8x32xf32, #tpu.memory_space<vmem>>, %arg2: memref<8x32xf32, #tpu.memory_space<vmem>>, %arg3: memref<32x16xf32, #tpu.memory_space<vmem>>, %arg4: memref<8x1xf32, #tpu.memory_space<vmem>>) attributes {dimension_semantics = [#tpu.dimension_semantics<parallel>], iteration_bounds = array<i64: 1>, scalar_prefetch = 0 : i64, scratch_operands = 0 : i64, tpu.core_type = #tpu.core_type<tc>, window_params = [{transform_indices = @transform_0, window_bounds = array<i64: 8, 32>}, {transform_indices = @transform_1, window_bounds = array<i64: 8, 32>}, {pipeline_mode = #tpu.pipeline_mode<synchronous>, transform_indices = @transform_2, window_bounds = array<i64: 32, 16>}, {transform_indices = @transform_3, window_bounds = array<i64: 8, 1>}]} {
    %c0 = arith.constant 0 : index
    %c0_0 = arith.constant 0 : index
    %0 = vector.load %arg1[%c0, %c0_0] : memref<8x32xf32, #tpu.memory_space<vmem>>, vector<8x32xf32>
    %cst = arith.constant 14.2857141 : f32
    %1 = vector.broadcast %cst : f32 to vector<8x32xf32>
    %2 = arith.mulf %0, %1 : vector<8x32xf32>
    %c0_1 = arith.constant 0 : index
    %c0_2 = arith.constant 0 : index
    %3 = vector.load %arg3[%c0_1, %c0_2] : memref<32x16xf32, #tpu.memory_space<vmem>>, vector<32x16xf32>
    %cst_3 = arith.constant dense<0.000000e+00> : vector<8x16xf32>
    %4 = tpu.matmul %2, %3, %cst_3 {dimension_numbers = #tpu.dot_dimension_numbers<[1], [0], [0], [1], [0, 0, 1, 1], [], []>} : vector<8x32xf32>, vector<32x16xf32>, vector<8x16xf32> -> vector<8x16xf32>
    %c8_i32 = arith.constant 8 : i32
    %5 = arith.muli %arg0, %c8_i32 : i32
    %6 = tpu.iota {dimensions = array<i32: 0>} : vector<8x16xi32>
    %7 = vector.broadcast %5 : i32 to vector<8x16xi32>
    %8 = arith.addi %6, %7 : vector<8x16xi32>
    %9 = tpu.iota {dimensions = array<i32: 1>} : vector<8x16xi32>
    %10 = arith.cmpi ne, %9, %8 : vector<8x16xi32>
    %cst_4 = arith.constant dense<0xFF800000> : vector<8xf32>
    %11 = vector.multi_reduction <maximumf>, %4, %cst_4 [1] : vector<8x16xf32> to vector<8xf32>
    %12 = vector.shape_cast %11 : vector<8xf32> to vector<8x1xf32>
    %13 = vector.broadcast %12 : vector<8x1xf32> to vector<8x16xf32>
    %14 = arith.subf %4, %13 : vector<8x16xf32>
    %15 = math.exp %14 : vector<8x16xf32>
    %cst_5 = arith.constant 0.000000e+00 : f32
    %16 = vector.broadcast %cst_5 : f32 to vector<8x16xf32>
    %17 = arith.select %10, %15, %16 : vector<8x16xi1>, vector<8x16xf32>
    %cst_6 = arith.constant dense<0.000000e+00> : vector<8xf32>
    %18 = vector.multi_reduction <add>, %17, %cst_6 [1] : vector<8x16xf32> to vector<8xf32>
    %19 = vector.shape_cast %18 : vector<8xf32> to vector<8x1xf32>
    %20 = math.log %19 : vector<8x1xf32>
    %c0_7 = arith.constant 0 : index
    %c0_8 = arith.constant 0 : index
    %21 = vector.load %arg2[%c0_7, %c0_8] : memref<8x32xf32, #tpu.memory_space<vmem>>, vector<8x32xf32>
    %22 = arith.mulf %2, %21 : vector<8x32xf32>
    %cst_9 = arith.constant dense<0.000000e+00> : vector<8xf32>
    %23 = vector.multi_reduction <add>, %22, %cst_9 [1] : vector<8x32xf32> to vector<8xf32>
    %24 = vector.shape_cast %23 : vector<8xf32> to vector<8x1xf32>
    %cst_10 = arith.constant 1.000000e+00 : f32
    %25 = vector.broadcast %cst_10 : f32 to vector<8x1xf32>
    %26 = arith.mulf %24, %25 : vector<8x1xf32>
    %27 = arith.subf %26, %12 : vector<8x1xf32>
    %28 = arith.subf %27, %20 : vector<8x1xf32>
    %cst_11 = arith.constant -1.000000e+00 : f32
    %29 = vector.broadcast %cst_11 : f32 to vector<8x1xf32>
    %30 = arith.mulf %29, %28 : vector<8x1xf32>
    %c0_12 = arith.constant 0 : index
    %c0_13 = arith.constant 0 : index
    %31 = vector.load %arg4[%c0_12, %c0_13] : memref<8x1xf32, #tpu.memory_space<vmem>>, vector<8x1xf32>
    tpu.vector_store %arg4[%c0_12, %c0_13], %30 {strides = array<i32>} : memref<8x1xf32, #tpu.memory_space<vmem>>, vector<8x1xf32>,
    return
  }
  func.func @transform_0(%arg0: i32) -> (i32, i32) {
    %c0_i32 = arith.constant 0 : i32
    %c0_i32_0 = arith.constant 0 : i32
    return %arg0, %c0_i32 : i32, i32
  }
  func.func @transform_1(%arg0: i32) -> (i32, i32) {
    %c0_i32 = arith.constant 0 : i32
    %c0_i32_0 = arith.constant 0 : i32
    return %arg0, %c0_i32 : i32, i32
  }
  func.func @transform_2(%arg0: i32) -> (i32, i32) {
    %c0_i32 = arith.constant 0 : i32
    %c0_i32_0 = arith.constant 0 : i32
    %c0_i32_1 = arith.constant 0 : i32
    return %c0_i32, %c0_i32_0 : i32, i32
  }
  func.func @transform_3(%arg0: i32) -> (i32, i32) {
    %c0_i32 = arith.constant 0 : i32
    %c0_i32_0 = arith.constant 0 : i32
    return %arg0, %c0_i32 : i32, i32
  }
}

</mosaic_0001>

<llo_original>
// kernel: tpu_custom_call.1
$region0: #{tpu_custom_call.1}
  #allocation0 [shape = 'u32[]', space=smem, size = 0x4, offset = 0x4, fixed_abs, tag = 'smem constant byte address 0x4 - core index']
  #allocation1 [shape = 'u32[144,128]{1,0:T(1,128)}', space=vmem, size = 0x12000, scoped, tag = 'internal scratch']
  %s0 = inlined_call_operand.vmem [shape: f32[8,32], index: 0, kind: input, shape index: {}]
  %s1 = inlined_call_operand.vmem [shape: f32[8,32], index: 1, kind: input, shape index: {}]
  %s2 = inlined_call_operand.vmem [shape: f32[32,16], index: 2, kind: input, shape index: {}]
  %s3 = inlined_call_operand.vmem [shape: f32[8,1], index: 3, kind: output, shape index: {}]
  %s4 = sld [smem:[#allocation0]]
  $region22: #{tpu_custom_call.1} parent=0
    _
  %s6 = ssub.s32 1, %s4
  %s7 = scalar_select 0, %s6, %s4
  // Predicated region
  $region2: #{tpu_custom_call.1} parent=0 // pred_check
    _
  $region3: #{tpu_custom_call.1} parent=0 // pred_check_branch
    %9 = sbr.rel (0) target = $region5
  $region4: #{tpu_custom_call.1} parent=0 // pred_region
    _
  $region5: #{tpu_custom_call.1} parent=0 // pred_fallthru
    _
  // Predicated region
  $region6: #{tpu_custom_call.1} parent=0 // pred_check
    _
  $region7: #{tpu_custom_call.1} parent=0 // pred_check_branch
    %11 = sbr.rel (0) target = $region9
  $region8: #{tpu_custom_call.1} parent=0 // pred_region
    _
  $region9: #{tpu_custom_call.1} parent=0 // pred_fallthru
    _
  // Predicated region
  $region10: #{tpu_custom_call.1} parent=0 // pred_check
    _
  $region11: #{tpu_custom_call.1} parent=0 // pred_check_branch
    %13 = sbr.rel (0) target = $region13
  $region12: #{tpu_custom_call.1} parent=0 // pred_region
    _
  $region13: #{tpu_custom_call.1} parent=0 // pred_fallthru
    _
  %v14 = vld [vmem:[%s0] sm:$0xff]
  %v15 = vmul.f32 %v14, 14.285714
  %v16 = vld [vmem:[%s2] sm:$0xff]
  %v17 = vld [vmem:[%s2 + $0x8] sm:$0xff]
  %v18 = vld [vmem:[%s2 + $0x10] sm:$0xff]
  %v19 = vld [vmem:[%s2 + $0x18] sm:$0xff]
  %vm20 = vcmask 261120
  %v22 = vsel %vm20, %v15, 0
  %24 = vmatprep.subr.mxu0 0.0
  %25 = vmatpush1.msra.mxu0 0.0
  %26 = vmatprep.subr.mxu0 0.0
  %27 = vmatpush1.msra.mxu0 0.0
  %28 = vmatprep.subr.mxu0 0.0
  %29 = vmatpush1.msra.mxu0 0.0
  %30 = vmatprep.subr.mxu0 0.0
  %31 = vmatpush1.msra.mxu0 0.0
  %32 = vmatprep.subr.mxu0 0.0
  %33 = vmatpush1.msra.mxu0 0.0
  %34 = vmatprep.subr.mxu0 0.0
  %35 = vmatpush1.msra.mxu0 0.0
  %36 = vmatprep.subr.mxu0 0.0
  %37 = vmatpush1.msra.mxu0 0.0
  %38 = vmatprep.subr.mxu0 0.0
  %39 = vmatpush1.msra.mxu0 0.0
  %40 = vmatprep.subr.mxu0 0.0
  %41 = vmatpush1.msra.mxu0 0.0
  %42 = vmatprep.subr.mxu0 0.0
  %43 = vmatpush1.msra.mxu0 0.0
  %44 = vmatprep.subr.mxu0 0.0
  %45 = vmatpush1.msra.mxu0 0.0
  %46 = vmatprep.subr.mxu0 0.0
  %47 = vmatpush1.msra.mxu0 0.0
  %48 = vmatprep.subr.mxu0 0.0
  %49 = vmatpush1.msra.mxu0 %v19
  %50 = vmatprep.subr.mxu0 0.0
  %51 = vmatpush1.msra.mxu0 %v18
  %52 = vmatprep.subr.mxu0 0.0
  %53 = vmatpush1.msra.mxu0 %v17
  %54 = vmatprep.subr.mxu0 0.0
  %55 = vmatpush1.msra.mxu0 %v16
  %56 = vmatprep.subr.mxu0 0.0
  %57 = vmatpush2.msra.mxu0 0.0
  %58 = vmatprep.subr.mxu0 0.0
  %59 = vmatpush2.msra.mxu0 0.0
  %60 = vmatprep.subr.mxu0 0.0
  %61 = vmatpush2.msra.mxu0 0.0
  %62 = vmatprep.subr.mxu0 0.0
  %63 = vmatpush2.msra.mxu0 0.0
  %64 = vmatprep.subr.mxu0 0.0
  %65 = vmatpush2.msra.mxu0 0.0
  %66 = vmatprep.subr.mxu0 0.0
  %67 = vmatpush2.msra.mxu0 0.0
  %68 = vmatprep.subr.mxu0 0.0
  %69 = vmatpush2.msra.mxu0 0.0
  %70 = vmatprep.subr.mxu0 0.0
  %71 = vmatpush2.msra.mxu0 0.0
  %72 = vmatprep.subr.mxu0 0.0
  %73 = vmatpush2.msra.mxu0 0.0
  %74 = vmatprep.subr.mxu0 0.0
  %75 = vmatpush2.msra.mxu0 0.0
  %76 = vmatprep.subr.mxu0 0.0
  %77 = vmatpush2.msra.mxu0 0.0
  %78 = vmatprep.subr.mxu0 0.0
  %79 = vmatpush2.msra.mxu0 0.0
  %80 = vmatprep.subr.mxu0 0.0
  %81 = vmatpush2.msra.mxu0 0.0
  %82 = vmatprep.subr.mxu0 0.0
  %83 = vmatpush2.msra.mxu0 0.0
  %84 = vmatprep.subr.mxu0 0.0
  %85 = vmatpush2.msra.mxu0 0.0
  %86 = vmatprep.subr.mxu0 0.0
  %87 = vmatpush2.msra.mxu0 0.0
  %88 = vmatprep.mubr.f32.mxu0 0.0
  %89 = vmatmul.mubr.f32.gmra.mxu0 %v22
  %v90 = vpop.f32.mrf.mxu0
  %v91 = vadd.f32 0.0, %v90
  %v92 = vpop.f32.mrf.mxu0
  %93 = vdwg.mxu0
  %s94 = smul.u32 0, 8
  %v95 = vlaneseq
  %v96 = vshrl.u32 %v95, 7
  %v97 = vstv %s94
  %v98 = vadd.s32 %v96, %v97
  %v99 = vlaneseq
  %v100 = vand.u32 %v99, 127
  %vm101 = vcmp.ne.s32.totalorder %v100, %v98
  %vm102 = vcmask 130048
  %v103 = vsel %vm102, %v91, -inf
  %104 = vmax.xlane.f32.xlu0 %v103
  %v105 = vpop.xlane.xlu0 %104
  %v106 = vsub.f32 %v91, %v105
  %v107 = vmul.f32 %v106, 1.442695
  %v108 = vpow.pop %v107
  %v109 = vsel %vm101, %v108, 0.0
  %v110 = vsel %vm102, %v109, 0.0
  %111 = vadd.xlane.f32.xlu0 %v110
  %v112 = vpop.xlane.xlu0 %111
  %v113 = vlog2.pop %v112
  %v114 = vmul.f32 %v113, 0.6931472
  %v115 = vld [vmem:[%s1] sm:$0xff]
  %v116 = vmul.f32 %v15, %v115
  %v117 = vsel %vm20, %v116, 0.0
  %118 = vadd.xlane.f32.xlu0 %v117
  %v119 = vpop.xlane.xlu0 %118
  %v120 = vsub.f32 %v119, %v105
  %v121 = vsub.f32 %v120, %v114
  %v122 = vmul.f32 %v121, -1.0
  %vm123 = vcmask 7168
  %124 = vst.msk [vmem:[%s3] sm:$0xff] %vm123, %v122
  // Predicated region
  $region14: #{tpu_custom_call.1} parent=0 // pred_check
    _
  $region15: #{tpu_custom_call.1} parent=0 // pred_check_branch
    %126 = sbr.rel (0) target = $region17
  $region16: #{tpu_custom_call.1} parent=0 // pred_region
    _
  $region17: #{tpu_custom_call.1} parent=0 // pred_fallthru
    _
  // Predicated region
  $region18: #{tpu_custom_call.1} parent=0 // pred_check
    _
  $region19: #{tpu_custom_call.1} parent=0 // pred_check_branch
    %128 = sbr.rel (0) target = $region21
  $region20: #{tpu_custom_call.1} parent=0 // pred_region
    _
  $region21: #{tpu_custom_call.1} parent=0 // pred_fallthru
    _

</llo_original>
